<compile_context>
chip_gen: v6e
topology: v6e:2x2x1
jax: 0.10.0
libtpu: 0.0.40
codegen_flags: <defaults>
</compile_context>

<pallas_src>
import jax
import jax.numpy as jnp
from jax.experimental import pallas as pl
from jax.experimental.pallas import tpu as pltpu

_FUSED_BYTES_LIMIT = 6 * 1024 * 1024       # whole-tensor-in-VMEM fast path threshold
_TARGET_BLOCK_BYTES = 4 * 1024 * 1024      # streaming per-input-block byte target (1-8 MB sweet spot)
_FUSED_VMEM_LIMIT = 48 * 1024 * 1024       # explicit scoped-VMEM budget (fits v7x's 64 MiB physical)
_STREAM_VMEM_LIMIT = 40 * 1024 * 1024


# -----------------------------------------------------------------------------
# Fused path: whole activation resident in VMEM, exact two-pass mean/variance.
# -----------------------------------------------------------------------------
def _fused_kernel(x_ref, o_ref):
    x = x_ref[...].astype(jnp.float32)                      # (B, C, NS)
    n = x.shape[0] * x.shape[2]
    mean = jnp.sum(x, axis=(0, 2), keepdims=True) / n       # (1, C, 1)
    xc = x - mean
    var = jnp.sum(xc * xc, axis=(0, 2), keepdims=True) / (n - 1)   # unbiased; n==1 -> NaN (== torch)
    inv = 1.0 / (jnp.sqrt(var) + 1e-6)                      # == exp(-log(std + 1e-6))
    o_ref[...] = (xc * inv).astype(o_ref.dtype)


# -----------------------------------------------------------------------------
# Streaming path, "wide" layout (general C): blocks are (C, TN).
# -----------------------------------------------------------------------------
def _make_wide_stats_kernel(ns_total, need_mask):
    def kernel(x_ref, shift_ref, s1_ref, s2_ref):
        t = pl.program_id(1)

        @pl.when(t == 0)
        def _():
            s1_ref[...] = jnp.zeros_like(s1_ref)
            s2_ref[...] = jnp.zeros_like(s2_ref)

        x = x_ref[...].astype(jnp.float32) - shift_ref[...]        # (C, TN), shifted
        if need_mask:  # ragged spatial tail of the cdiv grid: zero OOB columns
            tn = x.shape[1]
            col = jax.lax.broadcasted_iota(jnp.int32, x.shape, 1) + t * tn
            x = jnp.where(col < ns_total, x, 0.0)
        # Two separate per-channel accumulators (no per-step concatenate / interleave).
        s1_ref[...] += jnp.sum(x, axis=1, keepdims=True)
        s2_ref[...] += jnp.sum(x * x, axis=1, keepdims=True)

    return kernel


def _wide_normalize_kernel(x_ref, sb_ref, o_ref):
    sb = sb_ref[...]                                    # (C, 2): col 0 = scale, col 1 = bias
    if o_ref.dtype == jnp.bfloat16:
        sb = sb.astype(jnp.bfloat16)                    # keep the VPU in bf16 on v6e/v7x
    o_ref[...] = (x_ref[...] * sb[:, 0:1] + sb[:, 1:2]).astype(o_ref.dtype)


# -----------------------------------------------------------------------------
# Streaming path, "dense" small-C layout: blocks are (C, TS, 128), spatial data
# fills the sublane axis so vregs stay full when C < 8 (f32) / 16 (bf16).
# -----------------------------------------------------------------------------
def _make_dense_stats_kernel(sr_total, need_mask):
    def kernel(x_ref, shift_ref, s1_ref, s2_ref):
        t = pl.program_id(1)

        @pl.when(t == 0)
        def _():
            s1_ref[...] = jnp.zeros_like(s1_ref)
            s2_ref[...] = jnp.zeros_like(s2_ref)

        x = x_ref[...].astype(jnp.float32) - shift_ref[...]        # (C, TS, 128), shifted
        if need_mask:  # ragged tail along the sublane-row axis
            ts = x.shape[1]
            row = jax.lax.broadcasted_iota(jnp.int32, x.shape, 1) + t * ts
            x = jnp.where(row < sr_total, x, 0.0)
        s1_ref[...] += jnp.sum(x, axis=(1, 2), keepdims=True)
        s2_ref[...] += jnp.sum(x * x, axis=(1, 2), keepdims=True)

    return kernel


def _dense_normalize_kernel(x_ref, sb_ref, o_ref):
    # sb_ref lives in SMEM; per-channel scalars splat over a dense (TS, 128) slab,
    # so no half-empty sublanes and no (C,1) lane-broadcast operand.
    for c in range(x_ref.shape[0]):          # C < 8 (f32) / < 16 (bf16): tiny static loop
        o_ref[c] = (x_ref[c] * sb_ref[c, 0] + sb_ref[c, 1]).astype(o_ref.dtype)


# -----------------------------------------------------------------------------
# Byte-based tile selection (feedback: size blocks by bytes, not lane count).
# -----------------------------------------------------------------------------
def _pick_lane_tile(C, NS, itemsize, target_bytes):
    """TN for the (C, TN) layout: full extent if within budget, else a byte-sized multiple of 128."""
    if NS <= 128 or C * NS * itemsize <= target_bytes:
        return NS
    tn = (target_bytes // (C * itemsize)) // 128 * 128
    return int(min(max(128, tn), (NS // 128) * 128))


def _pick_sublane_tile(C, SR, itemsize, target_bytes):
    """TS (sublane rows) for the dense (C, TS, 128) layout."""
    if SR <= 8 or C * SR * 128 * itemsize <= target_bytes:
        return SR
    ts = (target_bytes // (C * 128 * itemsize)) // 8 * 8
    return int(min(max(8, ts), (SR // 8) * 8))


def actnorm_forward(x, *,
                    fused_bytes_limit=_FUSED_BYTES_LIMIT,
                    target_block_bytes=_TARGET_BLOCK_BYTES,
                    force_streaming=False):
    """x: NCHW float array. Returns ActNorm(x) (the wrapper module's single forward)."""
    B, C, H, W = x.shape
    NS = H * W
    N = B * NS                        # NOTE: N == 1 -> NaN, same as torch's unbiased std
    itemsize = x.dtype.itemsize
    x3 = x.reshape(B, C, NS)          # free reshape: trailing dims contiguous, no transpose

    # ------------- fused fast path: 2 HBM passes, exact two-pass variance -------------
    if not force_streaming and x.nbytes <= fused_bytes_limit:
        out3 = pl.pallas_call(
            _fused_kernel,
            out_shape=jax.ShapeDtypeStruct((B, C, NS), x.dtype),
            grid=(1,),
            in_specs=[pl.BlockSpec((B, C, NS), lambda i: (0, 0, 0))],
            out_specs=pl.BlockSpec((B, C, NS), lambda i: (0, 0, 0)),
            compiler_params=pltpu.CompilerParams(vmem_limit_bytes=_FUSED_VMEM_LIMIT),
        )(x3)
        return out3.reshape(B, C, H, W)

    # ------------- streaming: stats kernel + tiny JAX epilogue + normalize -------------
    # Per-channel shift (approximate mean from a small leading slice) -> shifted sums,
    # removing the catastrophic cancellation of the naive E[x^2] - mean^2 formula.
    k0 = min(128, NS)
    shift = jnp.mean(x3[:, :, :k0].astype(jnp.float32), axis=(0, 2))   # (C,)

    stats_params = pltpu.CompilerParams(
        dimension_semantics=("parallel", "arbitrary"),
        vmem_limit_bytes=_STREAM_VMEM_LIMIT)
    # TODO(synk): on v7x with B == 1 one TensorCore idles in phase 1; add a 2-way
    # "parallel" split of the spatial axis (per-half partials summed in the epilogue).
    norm_params = pltpu.CompilerParams(
        dimension_semantics=("parallel", "parallel"),
        vmem_limit_bytes=_STREAM_VMEM_LIMIT)

    dense = (C * itemsize < 32) and (NS % 128 == 0)   # small-C: fill sublanes with spatial data

    if dense:
        SR = NS // 128
        TS = _pick_sublane_tile(C, SR, itemsize, target_block_bytes)
        NT = pl.cdiv(SR, TS)
        need_mask = (SR % TS) != 0
        xr = x3.reshape(B, C, SR, 128)                # free reshape (NS % 128 == 0)
        p1, p2 = pl.pallas_call(
            _make_dense_stats_kernel(SR, need_mask),
            out_shape=(jax.ShapeDtypeStruct((B, C, 1, 1), jnp.float32),
                       jax.ShapeDtypeStruct((B, C, 1, 1), jnp.float32)),
            grid=(B, NT),
            in_specs=[pl.BlockSpec((None, C, TS, 128), lambda b, t: (b, 0, t, 0)),
                      pl.BlockSpec((C, 1, 1), lambda b, t: (0, 0, 0))],
            out_specs=[pl.BlockSpec((None, C, 1, 1), lambda b, t: (b, 0, 0, 0)),
                       pl.BlockSpec((None, C, 1, 1), lambda b, t: (b, 0, 0, 0))],
            compiler_params=stats_params,
        )(xr, shift.reshape(C, 1, 1))
    else:
        TN = _pick_lane_tile(C, NS, itemsize, target_block_bytes)
        NT = pl.cdiv(NS, TN)
        need_mask = (NS % TN) != 0
        p1, p2 = pl.pallas_call(
            _make_wide_stats_kernel(NS, need_mask),
            out_shape=(jax.ShapeDtypeStruct((B, C, 1), jnp.float32),
                       jax.ShapeDtypeStruct((B, C, 1), jnp.float32)),
            grid=(B, NT),
            in_specs=[pl.BlockSpec((None, C, TN), lambda b, t: (b, 0, t)),
                      pl.BlockSpec((C, 1), lambda b, t: (0, 0))],
            out_specs=[pl.BlockSpec((None, C, 1), lambda b, t: (b, 0, 0)),
                       pl.BlockSpec((None, C, 1), lambda b, t: (b, 0, 0))],
            compiler_params=stats_params,
        )(x3, shift.reshape(C, 1))

    # Tiny per-channel epilogue (C scalars) in plain JAX; off the HBM-bound critical path.
    s1 = jnp.sum(p1, axis=0).reshape(C)               # sum(x - shift)
    s2 = jnp.sum(p2, axis=0).reshape(C)               # sum((x - shift)^2)
    mean = shift + s1 / N
    var = (s2 - (s1 * s1) / N) / (N - 1)              # unbiased, shifted (well-conditioned)
    std = jnp.sqrt(jnp.maximum(var, 0.0))
    scale = 1.0 / (std + 1e-6)                        # == exp(-log(std + 1e-6))
    bias = -mean * scale
    sb = jnp.stack([scale, bias], axis=-1)            # (C, 2) float32, single packed operand

    # TODO(synk): if profiling on v7x still shows exposed DMA here, add
    # pipeline_mode=pl.Buffered(3) to the x BlockSpec (stay within the VMEM budget).
    if dense:
        out_r = pl.pallas_call(
            _dense_normalize_kernel,
            out_shape=jax.ShapeDtypeStruct((B, C, SR, 128), x.dtype),
            grid=(B, NT),
            in_specs=[pl.BlockSpec((None, C, TS, 128), lambda b, t: (b, 0, t, 0)),
                      pl.BlockSpec(memory_space=pltpu.MemorySpace.SMEM)],
            out_specs=pl.BlockSpec((None, C, TS, 128), lambda b, t: (b, 0, t, 0)),
            compiler_params=norm_params,
        )(xr, sb)
        out3 = out_r.reshape(B, C, NS)
    else:
        out3 = pl.pallas_call(
            _wide_normalize_kernel,
            out_shape=jax.ShapeDtypeStruct((B, C, NS), x.dtype),
            grid=(B, NT),
            in_specs=[pl.BlockSpec((None, C, TN), lambda b, t: (b, 0, t)),
                      pl.BlockSpec((C, 2), lambda b, t: (0, 0))],
            out_specs=pl.BlockSpec((None, C, TN), lambda b, t: (b, 0, t)),
            compiler_params=norm_params,
        )(x3, sb)

    return out3.reshape(B, C, H, W)


def actnorm_reference(x):
    """Pure-JAX reference matching torch semantics (unbiased std over dims (0,2,3))."""
    mean = jnp.mean(x, axis=(0, 2, 3), keepdims=True)
    n = x.shape[0] * x.shape[2] * x.shape[3]
    var = jnp.sum((x - mean) ** 2, axis=(0, 2, 3), keepdims=True) / (n - 1)
    std = jnp.sqrt(var)
    s = -jnp.log(std + 1e-6)
    t = -mean * jnp.exp(s)
    return x * jnp.exp(s) + t


if __name__ == "__main__":
    key = jax.random.PRNGKey(0)
    k0, k1, k2, k3 = jax.random.split(key, 4)

    # Primary (module-consistent small shape) -> fused single-kernel path.
    x = jax.random.normal(k0, (2, 4, 16, 16), dtype=jnp.float32) * 2.5 + 1.3
    out = jax.block_until_ready(actnorm_forward(x))
    assert out.shape == x.shape and out.dtype == x.dtype
    assert jnp.allclose(out, actnorm_reference(x), atol=1e-4, rtol=1e-4), "fused path mismatch"

    # Streaming "wide" layout (C >= 8); tiny block target exercises the ragged spatial tail.
    xw = jax.random.normal(k1, (2, 16, 24, 24), dtype=jnp.float32) * 1.7 - 0.8
    outw = jax.block_until_ready(
        actnorm_forward(xw, force_streaming=True, target_block_bytes=16 * 1024))
    assert jnp.allclose(outw, actnorm_reference(xw), atol=1e-4, rtol=1e-4), "wide path mismatch"

    # Streaming dense small-C layout (C < 8, NS % 128 == 0), single spatial tile.
    xd = jax.random.normal(k2, (2, 3, 16, 24), dtype=jnp.float32) * 0.9 + 3.0
    outd = jax.block_until_ready(actnorm_forward(xd, force_streaming=True))
    assert jnp.allclose(outd, actnorm_reference(xd), atol=1e-4, rtol=1e-4), "dense path mismatch"

    # Streaming dense layout with multiple spatial tiles + ragged sublane tail.
    xd2 = jax.random.normal(k3, (1, 4, 36, 32), dtype=jnp.float32) * 3.0 + 0.5
    outd2 = jax.block_until_ready(
        actnorm_forward(xd2, force_streaming=True, target_block_bytes=16 * 1024))
    assert jnp.allclose(outd2, actnorm_reference(xd2), atol=1e-4, rtol=1e-4), "dense ragged mismatch"

    print("KERNEL_OK")
</pallas_src>

<mosaic_0001>
module attributes {stable_mosaic.version = 11 : i64} {
  func.func @_fused_kernel(%arg0: i32, %arg1: memref<2x4x256xf32, #tpu.memory_space<vmem>>, %arg2: memref<2x4x256xf32, #tpu.memory_space<vmem>>) attributes {dimension_semantics = [#tpu.dimension_semantics<arbitrary>], iteration_bounds = array<i64: 1>, scalar_prefetch = 0 : i64, scratch_operands = 0 : i64, tpu.core_type = #tpu.core_type<tc>, window_params = [{pipeline_mode = #tpu.pipeline_mode<synchronous>, transform_indices = @transform_0, window_bounds = array<i64: 2, 4, 256>}, {pipeline_mode = #tpu.pipeline_mode<synchronous>, transform_indices = @transform_1, window_bounds = array<i64: 2, 4, 256>}]} {
    %c0 = arith.constant 0 : index
    %c0_0 = arith.constant 0 : index
    %c0_1 = arith.constant 0 : index
    %0 = vector.load %arg1[%c0, %c0_0, %c0_1] : memref<2x4x256xf32, #tpu.memory_space<vmem>>, vector<2x4x256xf32>
    %cst = arith.constant dense<0.000000e+00> : vector<4xf32>
    %1 = vector.multi_reduction <add>, %0, %cst [0, 2] : vector<2x4x256xf32> to vector<4xf32>
    %2 = vector.shape_cast %1 : vector<4xf32> to vector<1x4x1xf32>
    %cst_2 = arith.constant 5.120000e+02 : f32
    %3 = vector.broadcast %cst_2 : f32 to vector<1x4x1xf32>
    %4 = arith.divf %2, %3 : vector<1x4x1xf32>
    %5 = vector.broadcast %4 : vector<1x4x1xf32> to vector<2x4x256xf32>
    %6 = arith.subf %0, %5 : vector<2x4x256xf32>
    %7 = arith.mulf %6, %6 : vector<2x4x256xf32>
    %cst_3 = arith.constant dense<0.000000e+00> : vector<4xf32>
    %8 = vector.multi_reduction <add>, %7, %cst_3 [0, 2] : vector<2x4x256xf32> to vector<4xf32>
    %9 = vector.shape_cast %8 : vector<4xf32> to vector<1x4x1xf32>
    %cst_4 = arith.constant 5.110000e+02 : f32
    %10 = vector.broadcast %cst_4 : f32 to vector<1x4x1xf32>
    %11 = arith.divf %9, %10 : vector<1x4x1xf32>
    %12 = math.sqrt %11 : vector<1x4x1xf32>
    %cst_5 = arith.constant 9.99999997E-7 : f32
    %13 = vector.broadcast %cst_5 : f32 to vector<1x4x1xf32>
    %14 = arith.addf %12, %13 : vector<1x4x1xf32>
    %cst_6 = arith.constant 1.000000e+00 : f32
    %15 = vector.broadcast %cst_6 : f32 to vector<1x4x1xf32>
    %16 = arith.divf %15, %14 : vector<1x4x1xf32>
    %17 = vector.broadcast %16 : vector<1x4x1xf32> to vector<2x4x256xf32>
    %18 = arith.mulf %6, %17 : vector<2x4x256xf32>
    %c0_7 = arith.constant 0 : index
    %c0_8 = arith.constant 0 : index
    %c0_9 = arith.constant 0 : index
    %19 = vector.load %arg2[%c0_7, %c0_8, %c0_9] : memref<2x4x256xf32, #tpu.memory_space<vmem>>, vector<2x4x256xf32>
    tpu.vector_store %arg2[%c0_7, %c0_8, %c0_9], %18 {strides = array<i32>} : memref<2x4x256xf32, #tpu.memory_space<vmem>>, vector<2x4x256xf32>,
    return
  }
  func.func @transform_0(%arg0: i32) -> (i32, i32, i32) {
    %c0_i32 = arith.constant 0 : i32
    %c0_i32_0 = arith.constant 0 : i32
    %c0_i32_1 = arith.constant 0 : i32
    %c0_i32_2 = arith.constant 0 : i32
    return %c0_i32, %c0_i32_0, %c0_i32_1 : i32, i32, i32
  }
  func.func @transform_1(%arg0: i32) -> (i32, i32, i32) {
    %c0_i32 = arith.constant 0 : i32
    %c0_i32_0 = arith.constant 0 : i32
    %c0_i32_1 = arith.constant 0 : i32
    %c0_i32_2 = arith.constant 0 : i32
    return %c0_i32, %c0_i32_0, %c0_i32_1 : i32, i32, i32
  }
}

</mosaic_0001>

<llo_original>
// kernel: tpu_custom_call.1
$region0: #{tpu_custom_call.1}
  #allocation0 [shape = 'u32[]', space=smem, size = 0x4, offset = 0x4, fixed_abs, tag = 'smem constant byte address 0x4 - core index']
  #allocation1 [shape = 'u32[144,128]{1,0:T(1,128)}', space=vmem, size = 0x12000, scoped, tag = 'internal scratch']
  %s0 = inlined_call_operand.hbm [shape: f32[2,4,256], index: 0, kind: input, shape index: {}]
  %s1 = inlined_call_operand.hbm [shape: f32[2,4,256], index: 1, kind: output, shape index: {}]
  %s2 = sld [smem:[#allocation0]]
  $region18: #{tpu_custom_call.1} parent=0
    _
  %s4 = ssub.s32 1, %s2
  %s5 = scalar_select 0, %s4, %s2
  $region1: #{tpu_custom_call.1} parent=0
    #allocation2 [shape = 'u8[8192]{0}', space=vmem, size = 0x2000, scoped, tag = 'input window, operand 0, single buffered']
    #allocation3 [shape = 's32[1]{0}', space=sflag, size = 0x4, scoped, tag = 'scoped memory for tpu_custom_call.1']
    #allocation4 [shape = 's32[1]{0}', space=sflag, size = 0x4, scoped, tag = 'scoped memory for tpu_custom_call.1']
    #allocation5 [shape = 'u8[8192]{0}', space=vmem, size = 0x2000, scoped, tag = 'output window, operand 0, single buffered']
    %6 = vsyncpa [#allocation3], 0
    %7 = vsyncpa [#allocation4], 0
    // Predicated region
    $region2: #{tpu_custom_call.1} parent=1 // pred_check
      _
    $region3: #{tpu_custom_call.1} parent=1 // pred_check_branch
      %9 = sbr.rel (0) target = $region5
    $region4: #{tpu_custom_call.1} parent=1 // pred_region
      %s11 = ssub.s32 256, 256
      %12 = vsyncadd [#allocation3], %s11
      %s13 = sshll.u32 [#allocation2], 4
      %s14 = int_to_ptr.vmem [resolvable:$true] %s13
      %19 = dma.hbm_to_vmem [thread:$0]  %s0, 256, %s14, [#allocation3], 128, 128, 8
    $region5: #{tpu_custom_call.1} parent=1 // pred_fallthru
      _
    // Predicated region
    $region6: #{tpu_custom_call.1} parent=1 // pred_check
      _
    $region7: #{tpu_custom_call.1} parent=1 // pred_check_branch
      %21 = sbr.rel (0) target = $region9
    $region8: #{tpu_custom_call.1} parent=1 // pred_region
      %22 = dma.done [#allocation3], 256
    $region9: #{tpu_custom_call.1} parent=1 // pred_fallthru
      _
    %v23 = vld [vmem:[#allocation2] sm:$0xff]
    %v24 = vld [vmem:[#allocation2 + $0x8] sm:$0xff]
    %v27 = vcombine.high %v23, %v23
    %v28 = vcombine.high %v24, %v24
    %vm31 = vcmask 1043456
    %v32 = vsel %vm31, %v23, 0.0
    %v33 = vsel %vm31, %v27, 0.0
    %v34 = vadd.f32 %v32, %v33
    %v35 = vsel %vm31, %v24, 0.0
    %v36 = vadd.f32 %v34, %v35
    %v37 = vsel %vm31, %v28, 0.0
    %v38 = vadd.f32 %v36, %v37
    %39 = vadd.xlane.f32.xlu0 %v38
    %v40 = vpop.xlane.xlu0 %39
    %v41 = vrcp.pop 512.0
    %v42 = vmul.f32 %v40, %v41
    %v45 = vunpack.c.l.s4 839922192
    %v46 = vunpack.c.0.s8 %v45
    %v47 = vlaneseq
    %v48 = vshrl.u32 %v47, 7
    %v49 = vsub.s32 %v46, %v48
    %v50 = vrot.slane %v42, %v49
    %v52 = vsub.f32 %v23, %v50
    %v53 = vsub.f32 %v24, %v50
    %v54 = vmul.f32 %v52, %v52
    %v55 = vmul.f32 %v53, %v53
    %v58 = vcombine.high %v54, %v54
    %v59 = vcombine.high %v55, %v55
    %v62 = vsel %vm31, %v54, 0.0
    %v63 = vsel %vm31, %v58, 0.0
    %v64 = vadd.f32 %v62, %v63
    %v65 = vsel %vm31, %v55, 0.0
    %v66 = vadd.f32 %v64, %v65
    %v67 = vsel %vm31, %v59, 0.0
    %v68 = vadd.f32 %v66, %v67
    %69 = vadd.xlane.f32.xlu0 %v68
    %v70 = vpop.xlane.xlu0 %69
    %v71 = vrcp.pop 511.0
    %v72 = vmul.f32 %v70, %v71
    %v73 = vrsqrt.pop %v72
    %v74 = vmul.f32 %v72, %v73
    %vm75 = vcmp.eq.f32.partialorder %v72, inf
    %v76 = vsel %vm75, %v72, %v74
    %vm77 = vcmp.eq.f32.partialorder %v72, 0.0
    %v78 = vand.u32 %v72, 2147483648
    %v79 = vsel %vm77, %v78, %v76
    %v80 = vadd.f32 %v79, 1e-06
    %v81 = vrcp.pop %v80
    %v82 = vmul.f32 1.0, %v81
    %v85 = vunpack.c.l.s4 839922192
    %v86 = vunpack.c.0.s8 %v85
    %v87 = vlaneseq
    %v88 = vshrl.u32 %v87, 7
    %v89 = vsub.s32 %v86, %v88
    %v90 = vrot.slane %v82, %v89
    %v92 = vmul.f32 %v52, %v90
    %v93 = vmul.f32 %v53, %v90
    %94 = vst [vmem:[#allocation5] sm:$0xff] %v92
    %95 = vst [vmem:[#allocation5 + $0x8] sm:$0xff] %v93
    // Predicated region
    $region10: #{tpu_custom_call.1} parent=1 // pred_check
      _
    $region11: #{tpu_custom_call.1} parent=1 // pred_check_branch
      %97 = sbr.rel (0) target = $region13
    $region12: #{tpu_custom_call.1} parent=1 // pred_region
      %s99 = ssub.s32 256, 256
      %100 = vsyncadd [#allocation4], %s99
      %s101 = sshll.u32 [#allocation5], 4
      %s102 = int_to_ptr.vmem [resolvable:$true] %s101
      %107 = dma.vmem_to_hbm [thread:$0]  %s102, 256, %s1, [#allocation4], 128, 128, 8
    $region13: #{tpu_custom_call.1} parent=1 // pred_fallthru
      _
    // Predicated region
    $region14: #{tpu_custom_call.1} parent=1 // pred_check
      _
    $region15: #{tpu_custom_call.1} parent=1 // pred_check_branch
      %109 = sbr.rel (0) target = $region17
    $region16: #{tpu_custom_call.1} parent=1 // pred_region
      %110 = dma.done [#allocation4], 256
    $region17: #{tpu_custom_call.1} parent=1 // pred_fallthru
      _
    %111 = vsyncpa [#allocation3], 1
    %112 = vsyncpa [#allocation4], 1

</llo_original>
